<compile_context>
chip_gen: v5e
topology: v5e:2x2
jax: 0.10.0
libtpu: 0.0.40
codegen_flags: <defaults>
</compile_context>

<pallas_src>
import functools

import jax
import jax.numpy as jnp
from jax.experimental import pallas as pl
from jax.experimental.pallas import tpu as pltpu

_LANE = 128


def _cdiv(a, b):
    return -(-a // b)


def _round_up(x, m):
    return _cdiv(x, m) * m


def _finalize_std(m2, spatial):
    # Unbiased (ddof=1), matching torch.Tensor.std; n == 1 -> NaN like torch.
    if spatial > 1:
        var = m2 * (1.0 / (spatial - 1))
    else:
        var = m2 * jnp.float32(float("nan"))
    return jnp.sqrt(var)


def _std_pool_kernel(x_ref, o_ref, *scratch, spatial, ts):
    """Process one (tr, ts) chunk of the (rows, spatial) slab.

    No scratch  -> the block spans the whole spatial extent: exact two-pass std.
    With scratch -> the spatial axis is the innermost grid axis; per-chunk exact
    stats are merged across chunks with Chan's parallel (mean, M2) update.
    """
    x = x_ref[...].astype(jnp.float32)

    if not scratch:
        # Exact two-pass; expressions kept fused (no named full-block temporaries).
        mean = jnp.sum(x, axis=1, keepdims=True) * (1.0 / spatial)
        m2 = jnp.sum(jnp.square(x - mean), axis=1, keepdims=True)
        o_ref[...] = _finalize_std(m2, spatial).astype(o_ref.dtype)
        return

    mean_ref, m2_ref = scratch
    k = pl.program_id(1)

    @pl.when(k == 0)
    def _():
        mean_ref[...] = jnp.zeros_like(mean_ref)
        m2_ref[...] = jnp.zeros_like(m2_ref)

    base = k * ts                                                 # elements consumed so far
    n_c = jnp.minimum(ts, spatial - base).astype(jnp.float32)     # valid elems in this chunk
    col = jax.lax.broadcasted_iota(jnp.int32, x.shape, 1)
    valid = (base + col) < spatial                                # mask ragged last chunk
    xm = jnp.where(valid, x, 0.0)                                 # where(): no NaN leakage from padding
    mean_c = jnp.sum(xm, axis=1, keepdims=True) / n_c
    m2_c = jnp.sum(jnp.square(jnp.where(valid, x - mean_c, 0.0)), axis=1, keepdims=True)

    # Chan et al. parallel merge of running (mean, M2) with the chunk stats.
    n_a = base.astype(jnp.float32)
    n_new = n_a + n_c
    delta = mean_c - mean_ref[...]
    mean_ref[...] = mean_ref[...] + delta * (n_c / n_new)
    m2_ref[...] = m2_ref[...] + m2_c + (delta * delta) * (n_a * n_c / n_new)

    @pl.when(k == pl.num_programs(1) - 1)
    def _():
        o_ref[...] = _finalize_std(m2_ref[...], spatial).astype(o_ref.dtype)


def _pick_tiles(rows, spatial, dtype, vmem_budget_bytes):
    """Pick (tr, ts) from lane-padded VMEM footprints and a pipelining target."""
    itemsize = jnp.dtype(dtype).itemsize
    sub = 8 * max(1, 4 // itemsize)            # sublane pack: 8 f32, 16 bf16, 32 int8/fp8
    lanes_full = _round_up(spatial, _LANE)     # lanes are padded to 128 in VMEM
    # Conservative per-element VMEM cost: double-buffered input block + f32 compute
    # temporaries (also covers the upcast expansion for sub-f32 inputs).
    bytes_per_elem = 2 * itemsize + 8
    max_elems = max(sub * _LANE, vmem_budget_bytes // bytes_per_elem)

    if sub * lanes_full <= max_elems:
        ts = spatial                           # whole row per chunk -> exact two-pass path
        ts_pad = lanes_full
    else:
        # Chunk the spatial axis: bounded VMEM for arbitrarily large feature maps.
        ts = max(_LANE, (max_elems // sub) // _LANE * _LANE)
        ts_pad = ts

    # Row tile: as large as the budget allows, capped so the row axis still has
    # ~8 grid steps (software pipelining + megacore occupancy).
    tr_budget = max(sub, (max_elems // ts_pad) // sub * sub)
    tr_steps = max(sub, _round_up(_cdiv(rows, 8), sub))
    tr = min(tr_budget, tr_steps)
    if tr >= rows:
        tr = rows                              # full-extent block (always legal)
    else:
        # Nudge toward an even number of row steps (balances the two v7x TCs).
        num_i = _cdiv(rows, tr)
        if num_i > 1 and num_i % 2 == 1:
            tr_alt = max(sub, _round_up(_cdiv(rows, num_i + 1), sub))
            if tr_alt <= tr_budget and tr_alt < rows and _cdiv(rows, tr_alt) % 2 == 0:
                tr = tr_alt
    return tr, ts


def std_pool(x, *, vmem_budget_bytes=28 << 20):
    """x: (B, C, H, W) -> (B, C, 1, 1) unbiased std over the spatial dims."""
    b, c, h, w = x.shape
    rows, spatial = b * c, h * w
    x2 = x.reshape(rows, spatial)

    tr, ts = _pick_tiles(rows, spatial, x2.dtype, vmem_budget_bytes)
    num_i = _cdiv(rows, tr)
    num_k = _cdiv(spatial, ts)
    single_chunk = num_k == 1

    kernel = functools.partial(_std_pool_kernel, spatial=spatial, ts=ts)
    # Scratch only needed when the spatial axis is chunked; in that regime tr is
    # small, so the lane-padded (tr, 1) accumulators are a few KiB.
    scratch_shapes = [] if single_chunk else [
        pltpu.VMEM((tr, 1), jnp.float32),      # running mean
        pltpu.VMEM((tr, 1), jnp.float32),      # running centered sum of squares (M2)
    ]

    out = pl.pallas_call(
        kernel,
        out_shape=jax.ShapeDtypeStruct((rows, 1), x.dtype),
        grid_spec=pltpu.PrefetchScalarGridSpec(
            num_scalar_prefetch=0,
            grid=(num_i, num_k),               # reduction axis innermost
            in_specs=[pl.BlockSpec((tr, ts), lambda i, k: (i, k))],
            out_specs=pl.BlockSpec((tr, 1), lambda i, k: (i, 0)),
            scratch_shapes=scratch_shapes),
        compiler_params=pltpu.CompilerParams(
            dimension_semantics=("parallel", "arbitrary"),
            vmem_limit_bytes=40 << 20),
    )(x2)
    return out.reshape(b, c, 1, 1)


if __name__ == "__main__":
    key = jax.random.PRNGKey(0)
    k1, k2, k3, k4 = jax.random.split(key, 4)

    def ref_std(x):
        b, c, h, w = x.shape
        return jnp.std(x.reshape(b, c, -1), axis=2, ddof=1).reshape(b, c, 1, 1)

    fwd = jax.jit(std_pool)

    # 1) Aligned slab (module-typical small shape).
    # 2) Unaligned dims (odd H, W; rows < sublane tile).
    # 3) Many rows -> multiple row-grid steps (pipelined / megacore path).
    cases = [
        jax.random.normal(k1, (2, 4, 16, 16), jnp.float32),
        jax.random.normal(k2, (2, 3, 7, 5), jnp.float32) * 3.0 + 1.5,
        jax.random.normal(k3, (8, 128, 7, 7), jnp.float32) * 0.7 - 2.0,
    ]
    for x in cases:
        out = fwd(x)
        jax.block_until_ready(out)
        assert out.shape == (x.shape[0], x.shape[1], 1, 1), out.shape
        assert bool(jnp.all(jnp.isfinite(out)))
        assert bool(jnp.allclose(out, ref_std(x), rtol=1e-5, atol=1e-6)), \
            float(jnp.max(jnp.abs(out - ref_std(x))))

    # 4) Force the spatial-chunked (Chan-merge) path with a tiny VMEM budget:
    #    ragged last chunk + multi-step reduction grid axis.
    x_chunk = jax.random.normal(k4, (2, 4, 45, 37), jnp.float32) * 2.0 + 10.0
    fwd_chunk = jax.jit(lambda v: std_pool(v, vmem_budget_bytes=1 << 16))
    out = fwd_chunk(x_chunk)
    jax.block_until_ready(out)
    assert out.shape == (2, 4, 1, 1), out.shape
    assert bool(jnp.all(jnp.isfinite(out)))
    assert bool(jnp.allclose(out, ref_std(x_chunk), rtol=1e-4, atol=1e-5)), \
        float(jnp.max(jnp.abs(out - ref_std(x_chunk))))

    print("KERNEL_OK")
</pallas_src>

<mosaic_0001>
module attributes {stable_mosaic.version = 11 : i64} {
  func.func @_std_pool_kernel(%arg0: i32, %arg1: i32, %arg2: memref<8x256xf32, #tpu.memory_space<vmem>>, %arg3: memref<8x1xf32, #tpu.memory_space<vmem>>) attributes {dimension_semantics = [#tpu.dimension_semantics<parallel>, #tpu.dimension_semantics<arbitrary>], iteration_bounds = array<i64: 1, 1>, scalar_prefetch = 0 : i64, scratch_operands = 0 : i64, tpu.core_type = #tpu.core_type<tc>, window_params = [{transform_indices = @transform_0, window_bounds = array<i64: 8, 256>}, {transform_indices = @transform_1, window_bounds = array<i64: 8, 1>}]} {
    %c0 = arith.constant 0 : index
    %c0_0 = arith.constant 0 : index
    %0 = vector.load %arg2[%c0, %c0_0] : memref<8x256xf32, #tpu.memory_space<vmem>>, vector<8x256xf32>
    %cst = arith.constant dense<0.000000e+00> : vector<8xf32>
    %1 = vector.multi_reduction <add>, %0, %cst [1] : vector<8x256xf32> to vector<8xf32>
    %2 = vector.shape_cast %1 : vector<8xf32> to vector<8x1xf32>
    %cst_1 = arith.constant 3.906250e-03 : f32
    %3 = vector.broadcast %cst_1 : f32 to vector<8x1xf32>
    %4 = arith.mulf %2, %3 : vector<8x1xf32>
    %5 = vector.broadcast %4 : vector<8x1xf32> to vector<8x256xf32>
    %6 = arith.subf %0, %5 : vector<8x256xf32>
    %7 = arith.mulf %6, %6 : vector<8x256xf32>
    %cst_2 = arith.constant dense<0.000000e+00> : vector<8xf32>
    %8 = vector.multi_reduction <add>, %7, %cst_2 [1] : vector<8x256xf32> to vector<8xf32>
    %9 = vector.shape_cast %8 : vector<8xf32> to vector<8x1xf32>
    %cst_3 = arith.constant 0.00392156886 : f32
    %10 = vector.broadcast %cst_3 : f32 to vector<8x1xf32>
    %11 = arith.mulf %9, %10 : vector<8x1xf32>
    %12 = math.sqrt %11 : vector<8x1xf32>
    %c0_4 = arith.constant 0 : index
    %c0_5 = arith.constant 0 : index
    %13 = vector.load %arg3[%c0_4, %c0_5] : memref<8x1xf32, #tpu.memory_space<vmem>>, vector<8x1xf32>
    tpu.vector_store %arg3[%c0_4, %c0_5], %12 {strides = array<i32>} : memref<8x1xf32, #tpu.memory_space<vmem>>, vector<8x1xf32>,
    return
  }
  func.func @transform_0(%arg0: i32, %arg1: i32) -> (i32, i32) {
    %c0_i32 = arith.constant 0 : i32
    return %arg0, %arg1 : i32, i32
  }
  func.func @transform_1(%arg0: i32, %arg1: i32) -> (i32, i32) {
    %c0_i32 = arith.constant 0 : i32
    %c0_i32_0 = arith.constant 0 : i32
    return %arg0, %c0_i32 : i32, i32
  }
}

</mosaic_0001>

<llo_original>
// kernel: std_pool.1
$region0: #{std_pool.1}
  #allocation0 [shape = 'u32[]', space=smem, size = 0x4, offset = 0x4, fixed_abs, tag = 'smem constant byte address 0x4 - core index']
  #allocation1 [shape = 'u32[72,128]{1,0:T(1,128)}', space=vmem, size = 0x9000, scoped, tag = 'internal scratch']
  %s0 = inlined_call_operand.vmem [shape: f32[8,256], index: 0, kind: input, shape index: {}]
  %s1 = inlined_call_operand.vmem [shape: f32[8,1], index: 1, kind: output, shape index: {}]
  %s2 = sld [smem:[#allocation0]]
  $region14: #{std_pool.1} parent=0
    _
  %s4 = ssub.s32 1, %s2
  %s5 = scalar_select 0, %s4, %s2
  // Predicated region
  $region2: #{std_pool.1} parent=0 // pred_check
    _
  $region3: #{std_pool.1} parent=0 // pred_check_branch
    %7 = sbr.rel (0) target = $region5
  $region4: #{std_pool.1} parent=0 // pred_region
    _
  $region5: #{std_pool.1} parent=0 // pred_fallthru
    _
  %v8 = vld [vmem:[%s0] sm:$0xff]
  %v9 = vld [vmem:[%s0 + $0x8] sm:$0xff]
  %v10 = vadd.f32 %v8, %v9
  %11 = vadd.xlane.f32.xlu0 %v10
  %v12 = vpop.xlane.xlu0 %11
  %v13 = vmul.f32 %v12, 0.00390625
  %v14 = vsub.f32 %v8, %v13
  %v15 = vsub.f32 %v9, %v13
  %v16 = vmul.f32 %v14, %v14
  %v17 = vmul.f32 %v15, %v15
  %v18 = vadd.f32 %v16, %v17
  %19 = vadd.xlane.f32.xlu0 %v18
  %v20 = vpop.xlane.xlu0 %19
  %v21 = vmul.f32 %v20, 0.003921569
  %v22 = vrsqrt.pop %v21
  %v23 = vmul.f32 %v22, %v21
  %v24 = vmul.f32 %v23, %v22
  %v25 = vmul.f32 0.5, %v24
  %v26 = vsub.f32 1.5, %v25
  %v27 = vmul.f32 %v22, %v26
  %v28 = vmul.f32 %v21, %v27
  %vm29 = vcmp.eq.f32.partialorder %v21, inf
  %v30 = vsel %vm29, %v21, %v28
  %vm31 = vcmp.eq.f32.partialorder %v21, 0.0
  %v32 = vand.u32 %v21, 2147483648
  %v33 = vsel %vm31, %v32, %v30
  %vm34 = vcmask 7168
  %35 = vst.msk [vmem:[%s1] sm:$0xff] %vm34, %v33
  // Predicated region
  $region6: #{std_pool.1} parent=0 // pred_check
    _
  $region7: #{std_pool.1} parent=0 // pred_check_branch
    %37 = sbr.rel (0) target = $region9
  $region8: #{std_pool.1} parent=0 // pred_region
    _
  $region9: #{std_pool.1} parent=0 // pred_fallthru
    _
  // Predicated region
  $region10: #{std_pool.1} parent=0 // pred_check
    _
  $region11: #{std_pool.1} parent=0 // pred_check_branch
    %39 = sbr.rel (0) target = $region13
  $region12: #{std_pool.1} parent=0 // pred_region
    _
  $region13: #{std_pool.1} parent=0 // pred_fallthru
    _

</llo_original>
